<compile_context>
chip_gen: v5e
topology: v5e:2x2
jax: 0.10.0
libtpu: 0.0.40
codegen_flags: <defaults>
</compile_context>

<pallas_src>
import functools

import jax
import jax.numpy as jnp
from jax.experimental import pallas as pl
from jax.experimental.pallas import tpu as pltpu

NEG_SLOPE = 0.01          # nn.LeakyReLU default negative_slope
SUBLANES = 8              # f32 vreg sublane count
LANES = 128               # vreg lane count


def _leaky_relu(x):
    return jnp.where(x >= 0, x, NEG_SLOPE * x)


# ---------------------------------------------------------------------------
# Kernels
# ---------------------------------------------------------------------------
def policy_action_kernel(x_ref, wb_ref, action_ref, *, in_dim, action_size):
    """reduce=True per-step path: action = argmax(LeakyReLU(x @ W + b)), B == 1.

    x_ref      : SMEM (1, in_dim) f32 -- state, read as scalars (no masked vld)
    wb_ref     : VMEM (8, 128)    f32 -- packed params: rows 0..in_dim-1 = W_fused,
                                         row in_dim = b_fused, rest zero
    action_ref : SMEM (1, 1)      i32 -- device scalar action (scalar store, no
                                         vector writeback DMA)
    """
    wb = wb_ref[...]                                    # one aligned, unmasked vreg load
    acc = wb[in_dim:in_dim + 1, :]                      # bias row, (1, LANES)
    # Tiny contraction kept on the VPU: statically unrolled scalar*vector FMAs.
    for kk in range(in_dim):
        acc = acc + x_ref[0, kk] * wb[kk:kk + 1, :]
    logits = _leaky_relu(acc)                           # (1, LANES); padded lanes == 0

    # Argmax over valid lanes only (padded lanes forced to -inf so zero padding can
    # never win).  First-occurrence tie-break, matching torch.argmax.
    n_pad = wb.shape[1]
    col = jax.lax.broadcasted_iota(jnp.int32, (1, n_pad), 1)
    masked = jnp.where(col < action_size, logits, -jnp.inf)
    maxv = jnp.max(masked, axis=-1, keepdims=True)                 # (1, 1)
    idx = jnp.min(jnp.where(masked == maxv, col, n_pad))           # i32 scalar
    # All-NaN row would leave idx == n_pad; fall back to 0 (same as jnp.argmax).
    idx = jnp.where(idx >= action_size, 0, idx).astype(jnp.int32)
    action_ref[0, 0] = idx


def policy_logits_kernel(x_ref, wb_ref, out_ref, *, in_dim):
    """reduce=False path: LeakyReLU(x @ W_fused + b_fused) into a lane-dense (B, 128)."""
    x = x_ref[...]                                      # (B, in_dim) f32
    wb = wb_ref[...]                                    # (8, 128) packed params
    batch = x.shape[0]
    acc = jnp.broadcast_to(wb[in_dim:in_dim + 1, :], (batch, wb.shape[1]))
    for kk in range(in_dim):
        acc = acc + x[:, kk:kk + 1] * wb[kk:kk + 1, :]
    out_ref[...] = _leaky_relu(acc)                     # unmasked, 128-lane-dense store


# ---------------------------------------------------------------------------
# Parameters
# ---------------------------------------------------------------------------
def init_params(key, in_dim=4, action_size=6):
    """Deterministic synthetic parameters (PyTorch-style uniform fan-in init).

    Keeps the full PyTorch parameter structure (including the mathematically dead
    q/k convs) so the unfused reference can be checked against the fused kernel.
    Conv1d(kernel_size=1) weights are stored pre-transposed as (in, out).
    """
    hidden = max(8, in_dim)          # out = max(8, in_dim) in MlpAttention
    ck = max(1, hidden // 8)         # Self_Attn1D: q/k channels = in_dim // 8
    ks = jax.random.split(key, 10)

    def lin(k, fan_in, shape):
        bound = 1.0 / jnp.sqrt(jnp.float32(fan_in))
        return jax.random.uniform(k, shape, jnp.float32, -bound, bound)

    return dict(
        w1=lin(ks[0], in_dim, (in_dim, hidden)),       # input Linear
        b1=lin(ks[1], in_dim, (1, hidden)),
        wq=lin(ks[2], hidden, (hidden, ck)),           # query_conv (dead: softmax over T=1)
        bq=lin(ks[3], hidden, (1, ck)),
        wk=lin(ks[4], hidden, (hidden, ck)),           # key_conv   (dead)
        bk=lin(ks[5], hidden, (1, ck)),
        wv=lin(ks[6], hidden, (hidden, hidden)),       # value_conv
        bv=lin(ks[7], hidden, (1, hidden)),
        # PyTorch init is gamma=0 (attention branch disabled); 0.1 here so the value
        # path actually contributes to the fused weights in this test.
        gamma=jnp.full((1, 1), 0.1, jnp.float32),
        w2=lin(ks[8], hidden, (hidden, action_size)),  # output Linear
        b2=lin(ks[9], hidden, (1, action_size)),
    )


def fuse_params(p):
    """Fold input-Linear + length-1 Self_Attn1D + output-Linear into one affine map and
    pack (W_fused, b_fused) into a single zero-padded (8, 128) f32 tile:
        row k (k < in_dim) : W_fused[k, :]   row in_dim : b_fused   (lanes >= A are zero)
    """
    hidden = p["wv"].shape[0]
    gamma = p["gamma"][0, 0]
    m = gamma * p["wv"] + jnp.eye(hidden, dtype=jnp.float32)          # (H, H)
    mw2 = m @ p["w2"]                                                 # (H, A)
    w_fused = p["w1"] @ mw2                                           # (K, A)
    b_fused = p["b1"] @ mw2 + gamma * (p["bv"] @ p["w2"]) + p["b2"]   # (1, A)

    in_dim, action_size = w_fused.shape
    assert in_dim + 1 <= SUBLANES and action_size <= LANES
    wb = jnp.zeros((SUBLANES, LANES), jnp.float32)
    wb = wb.at[:in_dim, :action_size].set(w_fused)
    wb = wb.at[in_dim, :action_size].set(b_fused[0])
    return {"wb": wb, "in_dim": in_dim, "action_size": action_size}


def reference_forward(p, state):
    """Unfused pure-JAX reference, faithful to the PyTorch math (incl. dead attn branch)."""
    x = jnp.asarray(state, jnp.float32)
    h = x @ p["w1"] + p["b1"]
    q = h @ p["wq"] + p["bq"]                                  # (B, Ck) over T=1
    k = h @ p["wk"] + p["bk"]
    energy = jnp.sum(q * k, axis=-1, keepdims=True)            # (B, 1)
    attn = jax.nn.softmax(energy, axis=-1)                     # == 1.0 exactly (T=1)
    v = h @ p["wv"] + p["bv"]
    feat = p["gamma"][0, 0] * (v * attn) + h
    logits = feat @ p["w2"] + p["b2"]
    return _leaky_relu(logits)


# ---------------------------------------------------------------------------
# pallas_call wrappers
# ---------------------------------------------------------------------------
@functools.partial(jax.jit, static_argnames=("action_size",))
def _action_call(state, wb, *, action_size):
    in_dim = state.shape[1]
    kernel = functools.partial(policy_action_kernel, in_dim=in_dim,
                               action_size=action_size)
    action = pl.pallas_call(
        kernel,
        out_shape=jax.ShapeDtypeStruct((1, 1), jnp.int32),
        in_specs=[pl.BlockSpec(memory_space=pltpu.MemorySpace.SMEM),   # state scalars
                  pl.BlockSpec(memory_space=pltpu.MemorySpace.VMEM)],  # packed W|b tile
        out_specs=pl.BlockSpec(memory_space=pltpu.MemorySpace.SMEM),   # scalar action
        cost_estimate=pl.CostEstimate(
            flops=2 * in_dim * LANES + 2 * LANES,
            transcendentals=0,
            bytes_accessed=SUBLANES * LANES * 4 + in_dim * 4 + 4),
    )(state, wb)
    return action[0, 0]


@functools.partial(jax.jit, static_argnames=("action_size",))
def _logits_call(state, wb, *, action_size):
    batch, in_dim = state.shape
    kernel = functools.partial(policy_logits_kernel, in_dim=in_dim)
    padded = pl.pallas_call(
        kernel,
        out_shape=jax.ShapeDtypeStruct((batch, LANES), jnp.float32),
        in_specs=[pl.BlockSpec(memory_space=pltpu.MemorySpace.VMEM),
                  pl.BlockSpec(memory_space=pltpu.MemorySpace.VMEM)],
        out_specs=pl.BlockSpec(memory_space=pltpu.MemorySpace.VMEM),
        cost_estimate=pl.CostEstimate(
            flops=batch * (2 * in_dim * LANES + 2 * LANES),
            transcendentals=0,
            bytes_accessed=SUBLANES * LANES * 4 + batch * (in_dim + LANES) * 4),
        # No grid on purpose: overhead-bound at these sizes on v5e/v6e/v7x.  For very
        # large B, use coarse (>=512-row, 8-aligned) blocks + dimension_semantics=
        # ("parallel",) (2 TCs on v7x), and re-derive the block size against v7x's
        # 64 MiB VMEM / v5e's 16 MiB scoped default.
    )(state, wb)
    return padded[:, :action_size]


def policy_forward(fused_params, state, reduce=True):
    """Matches Policy.forward: reduce=True -> device int32 argmax action (Discrete
    action space assumed); reduce=False -> LeakyReLU logits."""
    state = jnp.asarray(state, jnp.float32)            # x = x.float()
    if state.ndim == 1:
        state = state[None, :]
    if reduce:
        # PyTorch path does x.squeeze(0) + argmax, only meaningful for a single state;
        # mirror that contract explicitly instead of silently using row 0.
        if state.shape[0] != 1:
            raise ValueError("reduce=True expects a single state (batch == 1)")
        # TODO(synk): environment.action_space Discrete check has no kernel equivalent;
        # a Discrete action space is assumed. Returns a device int32 scalar (no per-step
        # host sync; int() in the caller is the only sync point).
        return _action_call(state, fused_params["wb"],
                            action_size=fused_params["action_size"])
    return _logits_call(state, fused_params["wb"],
                        action_size=fused_params["action_size"])


if __name__ == "__main__":
    key = jax.random.PRNGKey(0)
    pkey, skey, bkey = jax.random.split(key, 3)

    ACTION_SIZE = 6
    IN_DIM = 4
    raw_params = init_params(pkey, in_dim=IN_DIM, action_size=ACTION_SIZE)
    fused_params = fuse_params(raw_params)

    # Single environment state, shape (1, 4) — matches squeeze(0) in reduce=True.
    state = jax.random.normal(skey, (1, IN_DIM), jnp.float32)

    # reduce=False: fused Pallas logits must match the unfused reference (which still
    # evaluates the dead q/k/softmax branch of Self_Attn1D).
    logits = policy_forward(fused_params, state, reduce=False)
    jax.block_until_ready(logits)
    ref = reference_forward(raw_params, state)
    assert logits.shape == (1, ACTION_SIZE)
    assert jnp.allclose(logits, ref, atol=1e-5, rtol=1e-5)

    # Batched reduce=False path (vectorized envs) stays a single gridless call.
    batch_states = jax.random.normal(bkey, (4, IN_DIM), jnp.float32)
    blogits = policy_forward(fused_params, batch_states, reduce=False)
    jax.block_until_ready(blogits)
    bref = reference_forward(raw_params, batch_states)
    assert blogits.shape == (4, ACTION_SIZE)
    assert jnp.allclose(blogits, bref, atol=1e-5, rtol=1e-5)

    # reduce=True: action-only kernel, in-kernel argmax, (1,1) int32 SMEM output.
    action = policy_forward(fused_params, state, reduce=True)
    jax.block_until_ready(action)
    a = int(action)  # host sync only here, in the test harness
    assert 0 <= a < ACTION_SIZE
    assert a == int(jnp.argmax(ref[0]))

    print("KERNEL_OK")
</pallas_src>

<mosaic_0001>
module attributes {stable_mosaic.version = 11 : i64} {
  func.func @policy_logits_kernel(%arg0: memref<1x4xf32, #tpu.memory_space<vmem>>, %arg1: memref<8x128xf32, #tpu.memory_space<vmem>>, %arg2: memref<1x128xf32, #tpu.memory_space<vmem>>) attributes {dimension_semantics = [], scalar_prefetch = 0 : i64, scratch_operands = 0 : i64, tpu.core_type = #tpu.core_type<tc>} {
    %c0 = arith.constant 0 : index
    %c0_0 = arith.constant 0 : index
    %0 = vector.load %arg0[%c0, %c0_0] : memref<1x4xf32, #tpu.memory_space<vmem>>, vector<1x4xf32>
    %c0_1 = arith.constant 0 : index
    %c0_2 = arith.constant 0 : index
    %1 = vector.load %arg1[%c0_1, %c0_2] : memref<8x128xf32, #tpu.memory_space<vmem>>, vector<8x128xf32>
    %2 = vector.extract_strided_slice %1 {offsets = [4, 0], sizes = [1, 128], strides = [1, 1]} : vector<8x128xf32> to vector<1x128xf32>
    %3 = vector.extract_strided_slice %0 {offsets = [0, 0], sizes = [1, 1], strides = [1, 1]} : vector<1x4xf32> to vector<1x1xf32>
    %4 = vector.extract_strided_slice %1 {offsets = [0, 0], sizes = [1, 128], strides = [1, 1]} : vector<8x128xf32> to vector<1x128xf32>
    %5 = vector.broadcast %3 : vector<1x1xf32> to vector<1x128xf32>
    %6 = arith.mulf %5, %4 : vector<1x128xf32>
    %7 = arith.addf %2, %6 : vector<1x128xf32>
    %8 = vector.extract_strided_slice %0 {offsets = [0, 1], sizes = [1, 1], strides = [1, 1]} : vector<1x4xf32> to vector<1x1xf32>
    %9 = vector.extract_strided_slice %1 {offsets = [1, 0], sizes = [1, 128], strides = [1, 1]} : vector<8x128xf32> to vector<1x128xf32>
    %10 = vector.broadcast %8 : vector<1x1xf32> to vector<1x128xf32>
    %11 = arith.mulf %10, %9 : vector<1x128xf32>
    %12 = arith.addf %7, %11 : vector<1x128xf32>
    %13 = vector.extract_strided_slice %0 {offsets = [0, 2], sizes = [1, 1], strides = [1, 1]} : vector<1x4xf32> to vector<1x1xf32>
    %14 = vector.extract_strided_slice %1 {offsets = [2, 0], sizes = [1, 128], strides = [1, 1]} : vector<8x128xf32> to vector<1x128xf32>
    %15 = vector.broadcast %13 : vector<1x1xf32> to vector<1x128xf32>
    %16 = arith.mulf %15, %14 : vector<1x128xf32>
    %17 = arith.addf %12, %16 : vector<1x128xf32>
    %18 = vector.extract_strided_slice %0 {offsets = [0, 3], sizes = [1, 1], strides = [1, 1]} : vector<1x4xf32> to vector<1x1xf32>
    %19 = vector.extract_strided_slice %1 {offsets = [3, 0], sizes = [1, 128], strides = [1, 1]} : vector<8x128xf32> to vector<1x128xf32>
    %20 = vector.broadcast %18 : vector<1x1xf32> to vector<1x128xf32>
    %21 = arith.mulf %20, %19 : vector<1x128xf32>
    %22 = arith.addf %17, %21 : vector<1x128xf32>
    %cst = arith.constant 0.000000e+00 : f32
    %23 = vector.broadcast %cst : f32 to vector<1x128xf32>
    %24 = arith.cmpf oge, %22, %23 : vector<1x128xf32>
    %cst_3 = arith.constant 0.00999999977 : f32
    %25 = vector.broadcast %cst_3 : f32 to vector<1x128xf32>
    %26 = arith.mulf %25, %22 : vector<1x128xf32>
    %27 = arith.select %24, %22, %26 : vector<1x128xi1>, vector<1x128xf32>
    %c0_4 = arith.constant 0 : index
    %c0_5 = arith.constant 0 : index
    %28 = vector.load %arg2[%c0_4, %c0_5] : memref<1x128xf32, #tpu.memory_space<vmem>>, vector<1x128xf32>
    tpu.vector_store %arg2[%c0_4, %c0_5], %27 {strides = array<i32>} : memref<1x128xf32, #tpu.memory_space<vmem>>, vector<1x128xf32>,
    return
  }
}

</mosaic_0001>

<llo_original>
// kernel: _logits_call.1
$region0: #{_logits_call.1}
  #allocation0 [shape = 'u32[]', space=smem, size = 0x4, offset = 0x4, fixed_abs, tag = 'smem constant byte address 0x4 - core index']
  #allocation1 [shape = 'u32[72,128]{1,0:T(1,128)}', space=vmem, size = 0x9000, scoped, tag = 'internal scratch']
  %s0 = inlined_call_operand.hbm [shape: f32[1,4], index: 0, kind: input, shape index: {}]
  %s1 = inlined_call_operand.hbm [shape: f32[8,128], index: 1, kind: input, shape index: {}]
  %s2 = inlined_call_operand.hbm [shape: f32[1,128], index: 2, kind: output, shape index: {}]
  %s3 = sld [smem:[#allocation0]]
  $region26: #{_logits_call.1} parent=0
    _
  %s5 = ssub.s32 1, %s3
  %s6 = scalar_select 0, %s5, %s3
  $region1: #{_logits_call.1} parent=0
    #allocation2 [shape = 'u8[512]{0}', space=vmem, size = 0x400, scoped, tag = 'input window, operand 0, single buffered']
    #allocation3 [shape = 's32[1]{0}', space=sflag, size = 0x4, scoped, tag = 'scoped memory for _logits_call.1']
    #allocation4 [shape = 's32[1]{0}', space=sflag, size = 0x4, scoped, tag = 'scoped memory for _logits_call.1']
    #allocation5 [shape = 'u8[4096]{0}', space=vmem, size = 0x1000, scoped, tag = 'input window, operand 1, single buffered']
    #allocation6 [shape = 's32[1]{0}', space=sflag, size = 0x4, scoped, tag = 'scoped memory for _logits_call.1']
    #allocation7 [shape = 'u8[512]{0}', space=vmem, size = 0x400, scoped, tag = 'output window, operand 0, single buffered']
    %7 = vsyncpa [#allocation3], 0
    %8 = vsyncpa [#allocation6], 0
    %9 = vsyncpa [#allocation4], 0
    // Predicated region
    $region2: #{_logits_call.1} parent=1 // pred_check
      _
    $region3: #{_logits_call.1} parent=1 // pred_check_branch
      %11 = sbr.rel (0) target = $region5
    $region4: #{_logits_call.1} parent=1 // pred_region
      %13 = vsyncadd [#allocation3], 0
      %s15 = sshll.u32 %s0, 4
      %s16 = int_to_ptr.hbm [resolvable:$true] %s15
      %s17 = sshll.u32 [#allocation2], 4
      %s18 = int_to_ptr.vmem [resolvable:$true] %s17
      %20 = dma.hbm_to_vmem [thread:$0]  %s16, 16, %s18, [#allocation3]
    $region5: #{_logits_call.1} parent=1 // pred_fallthru
      _
    // Predicated region
    $region6: #{_logits_call.1} parent=1 // pred_check
      _
    $region7: #{_logits_call.1} parent=1 // pred_check_branch
      %22 = sbr.rel (0) target = $region9
    $region8: #{_logits_call.1} parent=1 // pred_region
      %24 = vsyncadd [#allocation6], 0
      %s26 = sshll.u32 %s1, 4
      %s27 = int_to_ptr.hbm [resolvable:$true] %s26
      %s28 = sshll.u32 [#allocation5], 4
      %s29 = int_to_ptr.vmem [resolvable:$true] %s28
      %31 = dma.hbm_to_vmem [thread:$0]  %s27, 128, %s29, [#allocation6]
    $region9: #{_logits_call.1} parent=1 // pred_fallthru
      _
    // Predicated region
    $region10: #{_logits_call.1} parent=1 // pred_check
      _
    $region11: #{_logits_call.1} parent=1 // pred_check_branch
      %33 = sbr.rel (0) target = $region13
    $region12: #{_logits_call.1} parent=1 // pred_region
      %35 = dma.done [#allocation3], 16
    $region13: #{_logits_call.1} parent=1 // pred_fallthru
      _
    // Predicated region
    $region14: #{_logits_call.1} parent=1 // pred_check
      _
    $region15: #{_logits_call.1} parent=1 // pred_check_branch
      %37 = sbr.rel (0) target = $region17
    $region16: #{_logits_call.1} parent=1 // pred_region
      %39 = dma.done [#allocation6], 128
    $region17: #{_logits_call.1} parent=1 // pred_fallthru
      _
    %v40 = vld [vmem:[#allocation2] sm:$0x1]
    %v41 = vld [vmem:[#allocation5] sm:$0xff]
    %43 = vset.pattern.permute.xlu0 0
    %44 = vperm.xlu0 %43, %v40
    %v45 = vpop.permute.xlu0 %44
    %v47 = vperm.slane %v45, 0
    %v48 = vmul.f32 %v47, %v41
    %v50 = vrot.slane %v48, 4
    %v52 = vadd.f32 %v41, %v50
    %53 = vset.pattern.permute.xlu0 1
    %54 = vperm.xlu0 %53, %v40
    %v55 = vpop.permute.xlu0 %54
    %v57 = vperm.slane %v55, 0
    %v58 = vmul.f32 %v57, %v41
    %v60 = vrot.slane %v58, 5
    %v62 = vadd.f32 %v52, %v60
    %63 = vset.pattern.permute.xlu0 2
    %64 = vperm.xlu0 %63, %v40
    %v65 = vpop.permute.xlu0 %64
    %v67 = vperm.slane %v65, 0
    %v68 = vmul.f32 %v67, %v41
    %v70 = vrot.slane %v68, 6
    %v72 = vadd.f32 %v62, %v70
    %73 = vset.pattern.permute.xlu0 3
    %74 = vperm.xlu0 %73, %v40
    %v75 = vpop.permute.xlu0 %74
    %v77 = vperm.slane %v75, 0
    %v78 = vmul.f32 %v77, %v41
    %v80 = vrot.slane %v78, 7
    %v82 = vadd.f32 %v72, %v80
    %vm83 = vcmp.ge.f32.partialorder %v82, 0.0
    %v84 = vmul.f32 %v82, 0.01
    %v85 = vsel %vm83, %v82, %v84
    %86 = vst [vmem:[#allocation7 - $0x4] sm:$0x10] %v85
    // Predicated region
    $region18: #{_logits_call.1} parent=1 // pred_check
      _
    $region19: #{_logits_call.1} parent=1 // pred_check_branch
      %88 = sbr.rel (0) target = $region21
    $region20: #{_logits_call.1} parent=1 // pred_region
      %90 = vsyncadd [#allocation4], 0
      %s92 = sshll.u32 [#allocation7], 4
      %s93 = int_to_ptr.vmem [resolvable:$true] %s92
      %s94 = sshll.u32 %s2, 4
      %s95 = int_to_ptr.hbm [resolvable:$true] %s94
      %97 = dma.vmem_to_hbm [thread:$0]  %s93, 16, %s95, [#allocation4]
    $region21: #{_logits_call.1} parent=1 // pred_fallthru
      _
    // Predicated region
    $region22: #{_logits_call.1} parent=1 // pred_check
      _
    $region23: #{_logits_call.1} parent=1 // pred_check_branch
      %99 = sbr.rel (0) target = $region25
    $region24: #{_logits_call.1} parent=1 // pred_region
      %101 = dma.done [#allocation4], 16
    $region25: #{_logits_call.1} parent=1 // pred_fallthru
      _
    %102 = vsyncpa [#allocation3], 1
    %103 = vsyncpa [#allocation6], 1
    %104 = vsyncpa [#allocation4], 1

</llo_original>
